<compile_context>
chip_gen: v7x
topology: tpu7x:2x2x1
jax: 0.10.0
libtpu: 0.0.40
codegen_flags: <defaults>
</compile_context>

<pallas_src>
import functools

import jax
import jax.numpy as jnp
from jax import lax
from jax.experimental import pallas as pl
from jax.experimental.pallas import tpu as pltpu


def _mhsa_kernel(x_ref, wqkv_ref, bqkv_ref, wout_ref, bout_ref, o_ref, *,
                 num_heads, dim_heads, scale):
    # x_ref   : (1, S, D)   f32     wqkv_ref: (D, 3*Di) bf16   bqkv_ref: (1, 3*Di) f32
    # wout_ref: (Di, D)     bf16    bout_ref: (1, D)    f32    o_ref   : (1, S, D) f32
    di = num_heads * dim_heads

    x = x_ref[0].astype(jnp.bfloat16)                                       # (S, D)
    qkv = jnp.dot(x, wqkv_ref[...],
                  preferred_element_type=jnp.float32) + bqkv_ref[...]       # (S, 3*Di) f32

    q_all = qkv[:, 0 * di:1 * di]
    k_all = qkv[:, 1 * di:2 * di]
    v_all = qkv[:, 2 * di:3 * di]

    head_outs = []
    for h in range(num_heads):                       # static unroll, H small
        sl = slice(h * dim_heads, (h + 1) * dim_heads)
        q = (q_all[:, sl] * scale).astype(jnp.bfloat16)   # scale folded into q (O(S*dh))
        k = k_all[:, sl].astype(jnp.bfloat16)
        v = v_all[:, sl].astype(jnp.bfloat16)

        # scores = q @ k^T without an explicit transpose: contract last dims.
        s = lax.dot_general(q, k, (((1,), (1,)), ((), ())),
                            preferred_element_type=jnp.float32)             # (S, S) f32
        # TODO(synk): optional boolean `mask` (masked_fill -inf) not wired in;
        #             the PyTorch default (mask=None) path is implemented.
        m = jnp.max(s, axis=-1, keepdims=True)
        p = jnp.exp(s - m)
        denom = jnp.sum(p, axis=-1, keepdims=True)
        o_h = lax.dot_general(p.astype(jnp.bfloat16), v, (((1,), (0,)), ((), ())),
                              preferred_element_type=jnp.float32)           # (S, dh) f32
        # dropout(p=0.0) == identity (eval semantics); 1/denom folded into output.
        head_outs.append(o_h * pl.reciprocal(denom, approx=True))

    attn_out = jnp.concatenate(head_outs, axis=-1).astype(jnp.bfloat16)     # (S, Di)
    y = jnp.dot(attn_out, wout_ref[...],
                preferred_element_type=jnp.float32) + bout_ref[...]         # (S, D) f32
    o_ref[0] = y.astype(o_ref.dtype)


def mhsa_forward(x, params, num_heads):
    B, S, D = x.shape
    di = params["w_out"].shape[0]
    dh = di // num_heads
    scale = dh ** (-0.5)

    # Weights -> bf16 once (MXU-native, half the HBM bytes).  Activations stay
    # f32 in HBM and are cast in-kernel (avoids an extra host-side cast pass).
    w_qkv = params["w_qkv"].astype(jnp.bfloat16)
    w_out = params["w_out"].astype(jnp.bfloat16)
    b_qkv = params["b_qkv"].reshape(1, 3 * di).astype(jnp.float32)
    b_out = params["b_out"].reshape(1, D).astype(jnp.float32)

    kern = functools.partial(_mhsa_kernel, num_heads=num_heads, dim_heads=dh,
                             scale=scale)
    return pl.pallas_call(
        kern,
        out_shape=jax.ShapeDtypeStruct((B, S, D), x.dtype),
        grid=(B,),
        in_specs=[
            pl.BlockSpec((1, S, D), lambda b: (b, 0, 0)),
            pl.BlockSpec((D, 3 * di), lambda b: (0, 0)),   # same block index across
            pl.BlockSpec((1, 3 * di), lambda b: (0, 0)),   # the grid -> weights stay
            pl.BlockSpec((di, D), lambda b: (0, 0)),       # resident in VMEM
            pl.BlockSpec((1, D), lambda b: (0, 0)),
        ],
        out_specs=pl.BlockSpec((1, S, D), lambda b: (b, 0, 0)),
        compiler_params=pltpu.CompilerParams(
            dimension_semantics=("parallel",),   # B>=2 steps -> both v7x TCs used
            vmem_limit_bytes=32 * 1024 * 1024,
        ),
    )(x, w_qkv, b_qkv, w_out, b_out)


# ---------------------------------------------------------------------------
# Pure-JAX f32 reference (mirrors the PyTorch module)
# ---------------------------------------------------------------------------
def mhsa_reference(x, params, num_heads):
    B, S, D = x.shape
    qkv = x @ params["w_qkv"] + params["b_qkv"]
    di = qkv.shape[-1] // 3
    dh = di // num_heads
    q, k, v = jnp.split(qkv, 3, axis=-1)
    q = q.reshape(B, S, num_heads, dh).transpose(0, 2, 1, 3)
    k = k.reshape(B, S, num_heads, dh).transpose(0, 2, 1, 3)
    v = v.reshape(B, S, num_heads, dh).transpose(0, 2, 1, 3)
    attn = jnp.einsum("bhqd,bhkd->bhqk", q, k) * (dh ** -0.5)
    w_attn = jax.nn.softmax(attn, axis=-1)
    out = jnp.einsum("bhqk,bhkd->bhqd", w_attn, v)
    out = out.transpose(0, 2, 1, 3).reshape(B, S, di)
    return out @ params["w_out"] + params["b_out"]


if __name__ == "__main__":
    # Small shapes consistent with the module: dim_model=128, 4 heads x 32 dims.
    B, S, D = 2, 16, 128
    num_heads, dim_heads = 4, 32
    dim_inner = num_heads * dim_heads  # 128

    key = jax.random.PRNGKey(0)
    kx, k1, k2, k3, k4 = jax.random.split(key, 5)

    x = jax.random.normal(kx, (B, S, D), dtype=jnp.float32)
    params = {
        # stored pre-transposed as (in, out) for the kernels
        "w_qkv": jax.random.normal(k1, (D, 3 * dim_inner), dtype=jnp.float32) * 0.05,
        "b_qkv": jax.random.normal(k2, (3 * dim_inner,), dtype=jnp.float32) * 0.05,
        "w_out": jax.random.normal(k3, (dim_inner, D), dtype=jnp.float32) * 0.05,
        "b_out": jax.random.normal(k4, (D,), dtype=jnp.float32) * 0.05,
    }

    out = mhsa_forward(x, params, num_heads)
    jax.block_until_ready(out)

    ref = mhsa_reference(x, params, num_heads)
    assert out.shape == (B, S, D)
    # bf16 MXU inputs with f32 accumulation -> compare with a bf16-level tolerance.
    assert jnp.allclose(out, ref, atol=2e-2, rtol=2e-2), "mismatch vs reference"

    print("KERNEL_OK")
</pallas_src>

<mosaic_0001>
module attributes {stable_mosaic.version = 11 : i64} {
  func.func @_mhsa_kernel(%arg0: i32, %arg1: memref<1x16x128xf32, #tpu.memory_space<vmem>>, %arg2: memref<128x384xbf16, #tpu.memory_space<vmem>>, %arg3: memref<1x384xf32, #tpu.memory_space<vmem>>, %arg4: memref<128x128xbf16, #tpu.memory_space<vmem>>, %arg5: memref<1x128xf32, #tpu.memory_space<vmem>>, %arg6: memref<1x16x128xf32, #tpu.memory_space<vmem>>) attributes {dimension_semantics = [#tpu.dimension_semantics<parallel>], iteration_bounds = array<i64: 2>, scalar_prefetch = 0 : i64, scratch_operands = 0 : i64, tpu.core_type = #tpu.core_type<tc>, window_params = [{transform_indices = @transform_0, window_bounds = array<i64: 1, 16, 128>}, {pipeline_mode = #tpu.pipeline_mode<synchronous>, transform_indices = @transform_1, window_bounds = array<i64: 128, 384>}, {pipeline_mode = #tpu.pipeline_mode<synchronous>, transform_indices = @transform_2, window_bounds = array<i64: 1, 384>}, {pipeline_mode = #tpu.pipeline_mode<synchronous>, transform_indices = @transform_3, window_bounds = array<i64: 128, 128>}, {pipeline_mode = #tpu.pipeline_mode<synchronous>, transform_indices = @transform_4, window_bounds = array<i64: 1, 128>}, {transform_indices = @transform_5, window_bounds = array<i64: 1, 16, 128>}]} {
    %c0 = arith.constant 0 : index
    %c0_0 = arith.constant 0 : index
    %c0_1 = arith.constant 0 : index
    %0 = vector.load %arg1[%c0, %c0_0, %c0_1] : memref<1x16x128xf32, #tpu.memory_space<vmem>>, vector<1x16x128xf32>
    %1 = vector.shape_cast %0 : vector<1x16x128xf32> to vector<16x128xf32>
    %2 = arith.truncf %1 : vector<16x128xf32> to vector<16x128xbf16>
    %c0_2 = arith.constant 0 : index
    %c0_3 = arith.constant 0 : index
    %3 = vector.load %arg2[%c0_2, %c0_3] : memref<128x384xbf16, #tpu.memory_space<vmem>>, vector<128x384xbf16>
    %cst = arith.constant dense<0.000000e+00> : vector<16x384xf32>
    %4 = tpu.matmul %2, %3, %cst {dimension_numbers = #tpu.dot_dimension_numbers<[1], [0], [0], [1], [0, 0, 1, 1], [], []>} : vector<16x128xbf16>, vector<128x384xbf16>, vector<16x384xf32> -> vector<16x384xf32>
    %c0_4 = arith.constant 0 : index
    %c0_5 = arith.constant 0 : index
    %5 = vector.load %arg3[%c0_4, %c0_5] : memref<1x384xf32, #tpu.memory_space<vmem>>, vector<1x384xf32>
    %6 = vector.broadcast %5 : vector<1x384xf32> to vector<16x384xf32>
    %7 = arith.addf %4, %6 : vector<16x384xf32>
    %8 = vector.extract_strided_slice %7 {offsets = [0, 0], sizes = [16, 128], strides = [1, 1]} : vector<16x384xf32> to vector<16x128xf32>
    %9 = vector.extract_strided_slice %7 {offsets = [0, 128], sizes = [16, 128], strides = [1, 1]} : vector<16x384xf32> to vector<16x128xf32>
    %10 = vector.extract_strided_slice %7 {offsets = [0, 256], sizes = [16, 128], strides = [1, 1]} : vector<16x384xf32> to vector<16x128xf32>
    %11 = vector.extract_strided_slice %8 {offsets = [0, 0], sizes = [16, 32], strides = [1, 1]} : vector<16x128xf32> to vector<16x32xf32>
    %cst_6 = arith.constant 0.176776692 : f32
    %12 = vector.broadcast %cst_6 : f32 to vector<16x32xf32>
    %13 = arith.mulf %11, %12 : vector<16x32xf32>
    %14 = arith.truncf %13 : vector<16x32xf32> to vector<16x32xbf16>
    %15 = vector.extract_strided_slice %9 {offsets = [0, 0], sizes = [16, 32], strides = [1, 1]} : vector<16x128xf32> to vector<16x32xf32>
    %16 = arith.truncf %15 : vector<16x32xf32> to vector<16x32xbf16>
    %17 = vector.extract_strided_slice %10 {offsets = [0, 0], sizes = [16, 32], strides = [1, 1]} : vector<16x128xf32> to vector<16x32xf32>
    %18 = arith.truncf %17 : vector<16x32xf32> to vector<16x32xbf16>
    %cst_7 = arith.constant dense<0.000000e+00> : vector<16x16xf32>
    %19 = tpu.matmul %14, %16, %cst_7 {dimension_numbers = #tpu.dot_dimension_numbers<[1], [1], [0], [0], [0, 0, 1, 0], [], []>} : vector<16x32xbf16>, vector<16x32xbf16>, vector<16x16xf32> -> vector<16x16xf32>
    %cst_8 = arith.constant dense<0xFF800000> : vector<16xf32>
    %20 = vector.multi_reduction <maximumf>, %19, %cst_8 [1] : vector<16x16xf32> to vector<16xf32>
    %21 = vector.shape_cast %20 : vector<16xf32> to vector<16x1xf32>
    %22 = vector.broadcast %21 : vector<16x1xf32> to vector<16x16xf32>
    %23 = arith.subf %19, %22 : vector<16x16xf32>
    %24 = math.exp %23 : vector<16x16xf32>
    %cst_9 = arith.constant dense<0.000000e+00> : vector<16xf32>
    %25 = vector.multi_reduction <add>, %24, %cst_9 [1] : vector<16x16xf32> to vector<16xf32>
    %26 = vector.shape_cast %25 : vector<16xf32> to vector<16x1xf32>
    %27 = arith.truncf %24 : vector<16x16xf32> to vector<16x16xbf16>
    %cst_10 = arith.constant dense<0.000000e+00> : vector<16x32xf32>
    %28 = tpu.matmul %27, %18, %cst_10 {dimension_numbers = #tpu.dot_dimension_numbers<[1], [0], [0], [1], [0, 0, 1, 1], [], []>} : vector<16x16xbf16>, vector<16x32xbf16>, vector<16x32xf32> -> vector<16x32xf32>
    %29 = tpu.reciprocal %26 {approx = true} : vector<16x1xf32> -> vector<16x1xf32>
    %30 = vector.broadcast %29 : vector<16x1xf32> to vector<16x32xf32>
    %31 = arith.mulf %28, %30 : vector<16x32xf32>
    %32 = vector.extract_strided_slice %8 {offsets = [0, 32], sizes = [16, 32], strides = [1, 1]} : vector<16x128xf32> to vector<16x32xf32>
    %cst_11 = arith.constant 0.176776692 : f32
    %33 = vector.broadcast %cst_11 : f32 to vector<16x32xf32>
    %34 = arith.mulf %32, %33 : vector<16x32xf32>
    %35 = arith.truncf %34 : vector<16x32xf32> to vector<16x32xbf16>
    %36 = vector.extract_strided_slice %9 {offsets = [0, 32], sizes = [16, 32], strides = [1, 1]} : vector<16x128xf32> to vector<16x32xf32>
    %37 = arith.truncf %36 : vector<16x32xf32> to vector<16x32xbf16>
    %38 = vector.extract_strided_slice %10 {offsets = [0, 32], sizes = [16, 32], strides = [1, 1]} : vector<16x128xf32> to vector<16x32xf32>
    %39 = arith.truncf %38 : vector<16x32xf32> to vector<16x32xbf16>
    %cst_12 = arith.constant dense<0.000000e+00> : vector<16x16xf32>
    %40 = tpu.matmul %35, %37, %cst_12 {dimension_numbers = #tpu.dot_dimension_numbers<[1], [1], [0], [0], [0, 0, 1, 0], [], []>} : vector<16x32xbf16>, vector<16x32xbf16>, vector<16x16xf32> -> vector<16x16xf32>
    %cst_13 = arith.constant dense<0xFF800000> : vector<16xf32>
    %41 = vector.multi_reduction <maximumf>, %40, %cst_13 [1] : vector<16x16xf32> to vector<16xf32>
    %42 = vector.shape_cast %41 : vector<16xf32> to vector<16x1xf32>
    %43 = vector.broadcast %42 : vector<16x1xf32> to vector<16x16xf32>
    %44 = arith.subf %40, %43 : vector<16x16xf32>
    %45 = math.exp %44 : vector<16x16xf32>
    %cst_14 = arith.constant dense<0.000000e+00> : vector<16xf32>
    %46 = vector.multi_reduction <add>, %45, %cst_14 [1] : vector<16x16xf32> to vector<16xf32>
    %47 = vector.shape_cast %46 : vector<16xf32> to vector<16x1xf32>
    %48 = arith.truncf %45 : vector<16x16xf32> to vector<16x16xbf16>
    %cst_15 = arith.constant dense<0.000000e+00> : vector<16x32xf32>
    %49 = tpu.matmul %48, %39, %cst_15 {dimension_numbers = #tpu.dot_dimension_numbers<[1], [0], [0], [1], [0, 0, 1, 1], [], []>} : vector<16x16xbf16>, vector<16x32xbf16>, vector<16x32xf32> -> vector<16x32xf32>
    %50 = tpu.reciprocal %47 {approx = true} : vector<16x1xf32> -> vector<16x1xf32>
    %51 = vector.broadcast %50 : vector<16x1xf32> to vector<16x32xf32>
    %52 = arith.mulf %49, %51 : vector<16x32xf32>
    %53 = vector.extract_strided_slice %8 {offsets = [0, 64], sizes = [16, 32], strides = [1, 1]} : vector<16x128xf32> to vector<16x32xf32>
    %cst_16 = arith.constant 0.176776692 : f32
    %54 = vector.broadcast %cst_16 : f32 to vector<16x32xf32>
    %55 = arith.mulf %53, %54 : vector<16x32xf32>
    %56 = arith.truncf %55 : vector<16x32xf32> to vector<16x32xbf16>
    %57 = vector.extract_strided_slice %9 {offsets = [0, 64], sizes = [16, 32], strides = [1, 1]} : vector<16x128xf32> to vector<16x32xf32>
    %58 = arith.truncf %57 : vector<16x32xf32> to vector<16x32xbf16>
    %59 = vector.extract_strided_slice %10 {offsets = [0, 64], sizes = [16, 32], strides = [1, 1]} : vector<16x128xf32> to vector<16x32xf32>
    %60 = arith.truncf %59 : vector<16x32xf32> to vector<16x32xbf16>
    %cst_17 = arith.constant dense<0.000000e+00> : vector<16x16xf32>
    %61 = tpu.matmul %56, %58, %cst_17 {dimension_numbers = #tpu.dot_dimension_numbers<[1], [1], [0], [0], [0, 0, 1, 0], [], []>} : vector<16x32xbf16>, vector<16x32xbf16>, vector<16x16xf32> -> vector<16x16xf32>
    %cst_18 = arith.constant dense<0xFF800000> : vector<16xf32>
    %62 = vector.multi_reduction <maximumf>, %61, %cst_18 [1] : vector<16x16xf32> to vector<16xf32>
    %63 = vector.shape_cast %62 : vector<16xf32> to vector<16x1xf32>
    %64 = vector.broadcast %63 : vector<16x1xf32> to vector<16x16xf32>
    %65 = arith.subf %61, %64 : vector<16x16xf32>
    %66 = math.exp %65 : vector<16x16xf32>
    %cst_19 = arith.constant dense<0.000000e+00> : vector<16xf32>
    %67 = vector.multi_reduction <add>, %66, %cst_19 [1] : vector<16x16xf32> to vector<16xf32>
    %68 = vector.shape_cast %67 : vector<16xf32> to vector<16x1xf32>
    %69 = arith.truncf %66 : vector<16x16xf32> to vector<16x16xbf16>
    %cst_20 = arith.constant dense<0.000000e+00> : vector<16x32xf32>
    %70 = tpu.matmul %69, %60, %cst_20 {dimension_numbers = #tpu.dot_dimension_numbers<[1], [0], [0], [1], [0, 0, 1, 1], [], []>} : vector<16x16xbf16>, vector<16x32xbf16>, vector<16x32xf32> -> vector<16x32xf32>
    %71 = tpu.reciprocal %68 {approx = true} : vector<16x1xf32> -> vector<16x1xf32>
    %72 = vector.broadcast %71 : vector<16x1xf32> to vector<16x32xf32>
    %73 = arith.mulf %70, %72 : vector<16x32xf32>
    %74 = vector.extract_strided_slice %8 {offsets = [0, 96], sizes = [16, 32], strides = [1, 1]} : vector<16x128xf32> to vector<16x32xf32>
    %cst_21 = arith.constant 0.176776692 : f32
    %75 = vector.broadcast %cst_21 : f32 to vector<16x32xf32>
    %76 = arith.mulf %74, %75 : vector<16x32xf32>
    %77 = arith.truncf %76 : vector<16x32xf32> to vector<16x32xbf16>
    %78 = vector.extract_strided_slice %9 {offsets = [0, 96], sizes = [16, 32], strides = [1, 1]} : vector<16x128xf32> to vector<16x32xf32>
    %79 = arith.truncf %78 : vector<16x32xf32> to vector<16x32xbf16>
    %80 = vector.extract_strided_slice %10 {offsets = [0, 96], sizes = [16, 32], strides = [1, 1]} : vector<16x128xf32> to vector<16x32xf32>
    %81 = arith.truncf %80 : vector<16x32xf32> to vector<16x32xbf16>
    %cst_22 = arith.constant dense<0.000000e+00> : vector<16x16xf32>
    %82 = tpu.matmul %77, %79, %cst_22 {dimension_numbers = #tpu.dot_dimension_numbers<[1], [1], [0], [0], [0, 0, 1, 0], [], []>} : vector<16x32xbf16>, vector<16x32xbf16>, vector<16x16xf32> -> vector<16x16xf32>
    %cst_23 = arith.constant dense<0xFF800000> : vector<16xf32>
    %83 = vector.multi_reduction <maximumf>, %82, %cst_23 [1] : vector<16x16xf32> to vector<16xf32>
    %84 = vector.shape_cast %83 : vector<16xf32> to vector<16x1xf32>
    %85 = vector.broadcast %84 : vector<16x1xf32> to vector<16x16xf32>
    %86 = arith.subf %82, %85 : vector<16x16xf32>
    %87 = math.exp %86 : vector<16x16xf32>
    %cst_24 = arith.constant dense<0.000000e+00> : vector<16xf32>
    %88 = vector.multi_reduction <add>, %87, %cst_24 [1] : vector<16x16xf32> to vector<16xf32>
    %89 = vector.shape_cast %88 : vector<16xf32> to vector<16x1xf32>
    %90 = arith.truncf %87 : vector<16x16xf32> to vector<16x16xbf16>
    %cst_25 = arith.constant dense<0.000000e+00> : vector<16x32xf32>
    %91 = tpu.matmul %90, %81, %cst_25 {dimension_numbers = #tpu.dot_dimension_numbers<[1], [0], [0], [1], [0, 0, 1, 1], [], []>} : vector<16x16xbf16>, vector<16x32xbf16>, vector<16x32xf32> -> vector<16x32xf32>
    %92 = tpu.reciprocal %89 {approx = true} : vector<16x1xf32> -> vector<16x1xf32>
    %93 = vector.broadcast %92 : vector<16x1xf32> to vector<16x32xf32>
    %94 = arith.mulf %91, %93 : vector<16x32xf32>
    %95 = tpu.concatenate %31, %52, %73, %94 in 1 : vector<16x32xf32>, vector<16x32xf32>, vector<16x32xf32>, vector<16x32xf32> -> vector<16x128xf32>
    %96 = arith.truncf %95 : vector<16x128xf32> to vector<16x128xbf16>
    %c0_26 = arith.constant 0 : index
    %c0_27 = arith.constant 0 : index
    %97 = vector.load %arg4[%c0_26, %c0_27] : memref<128x128xbf16, #tpu.memory_space<vmem>>, vector<128x128xbf16>
    %cst_28 = arith.constant dense<0.000000e+00> : vector<16x128xf32>
    %98 = tpu.matmul %96, %97, %cst_28 {dimension_numbers = #tpu.dot_dimension_numbers<[1], [0], [0], [1], [0, 0, 1, 1], [], []>} : vector<16x128xbf16>, vector<128x128xbf16>, vector<16x128xf32> -> vector<16x128xf32>
    %c0_29 = arith.constant 0 : index
    %c0_30 = arith.constant 0 : index
    %99 = vector.load %arg5[%c0_29, %c0_30] : memref<1x128xf32, #tpu.memory_space<vmem>>, vector<1x128xf32>
    %100 = vector.broadcast %99 : vector<1x128xf32> to vector<16x128xf32>
    %101 = arith.addf %98, %100 : vector<16x128xf32>
    %c0_31 = arith.constant 0 : index
    %c0_32 = arith.constant 0 : index
    %c0_33 = arith.constant 0 : index
    %102 = vector.load %arg6[%c0_31, %c0_32, %c0_33] : memref<1x16x128xf32, #tpu.memory_space<vmem>>, vector<1x16x128xf32>
    %103 = vector.shape_cast %102 : vector<1x16x128xf32> to vector<16x128xf32>
    %104 = vector.shape_cast %101 : vector<16x128xf32> to vector<1x16x128xf32>
    tpu.vector_store %arg6[%c0_31, %c0_32, %c0_33], %104 {strides = array<i32>} : memref<1x16x128xf32, #tpu.memory_space<vmem>>, vector<1x16x128xf32>,
    return
  }
  func.func @transform_0(%arg0: i32) -> (i32, i32, i32) {
    %c0_i32 = arith.constant 0 : i32
    %c0_i32_0 = arith.constant 0 : i32
    %c0_i32_1 = arith.constant 0 : i32
    return %arg0, %c0_i32, %c0_i32_0 : i32, i32, i32
  }
  func.func @transform_1(%arg0: i32) -> (i32, i32) {
    %c0_i32 = arith.constant 0 : i32
    %c0_i32_0 = arith.constant 0 : i32
    %c0_i32_1 = arith.constant 0 : i32
    return %c0_i32, %c0_i32_0 : i32, i32
  }
  func.func @transform_2(%arg0: i32) -> (i32, i32) {
    %c0_i32 = arith.constant 0 : i32
    %c0_i32_0 = arith.constant 0 : i32
    %c0_i32_1 = arith.constant 0 : i32
    return %c0_i32, %c0_i32_0 : i32, i32
  }
  func.func @transform_3(%arg0: i32) -> (i32, i32) {
    %c0_i32 = arith.constant 0 : i32
    %c0_i32_0 = arith.constant 0 : i32
    %c0_i32_1 = arith.constant 0 : i32
    return %c0_i32, %c0_i32_0 : i32, i32
  }
  func.func @transform_4(%arg0: i32) -> (i32, i32) {
    %c0_i32 = arith.constant 0 : i32
    %c0_i32_0 = arith.constant 0 : i32
    %c0_i32_1 = arith.constant 0 : i32
    return %c0_i32, %c0_i32_0 : i32, i32
  }
  func.func @transform_5(%arg0: i32) -> (i32, i32, i32) {
    %c0_i32 = arith.constant 0 : i32
    %c0_i32_0 = arith.constant 0 : i32
    %c0_i32_1 = arith.constant 0 : i32
    return %arg0, %c0_i32, %c0_i32_0 : i32, i32, i32
  }
}

</mosaic_0001>

<llo_original>
// kernel: tpu_custom_call.1
$region0: #{tpu_custom_call.1}
  #allocation0 [shape = 'u32[]', space=smem, size = 0x4, offset = 0x4, fixed_abs, tag = 'smem constant byte address 0x4 - core index']
  #allocation1 [shape = 'u32[144,128]{1,0:T(1,128)}', space=vmem, size = 0x12000, scoped, tag = 'internal scratch']
  %s0 = inlined_call_operand.hbm [shape: f32[2,16,128], index: 0, kind: input, shape index: {}]
  %s1 = inlined_call_operand.hbm [shape: bf16[128,384], index: 1, kind: input, shape index: {}]
  %s2 = inlined_call_operand.vmem [shape: f32[1,384], index: 2, kind: input, shape index: {}]
  %s3 = inlined_call_operand.hbm [shape: bf16[128,128], index: 3, kind: input, shape index: {}]
  %s4 = inlined_call_operand.vmem [shape: f32[1,128], index: 4, kind: input, shape index: {}]
  %s5 = inlined_call_operand.hbm [shape: f32[2,16,128], index: 5, kind: output, shape index: {}]
  %s6 = sld [smem:[#allocation0]]
  $region65: #{tpu_custom_call.1} parent=0
    _
  %s8 = ssub.s32 1, %s6
  %s9 = scalar_select 0, %s8, %s6
  $region1: #{tpu_custom_call.1} parent=0
    #allocation2 [shape = 'u8[16384]{0}', space=vmem, size = 0x4000, scoped, tag = 'input window, operand 0']
    #allocation3 [shape = 's32[2]{0}', space=sflag, size = 0x8, scoped, tag = 'scoped memory for tpu_custom_call.1']
    #allocation4 [shape = 's32[2]{0}', space=sflag, size = 0x8, scoped, tag = 'scoped memory for tpu_custom_call.1']
    #allocation5 [shape = 'u8[98304]{0}', space=vmem, size = 0x18000, scoped, tag = 'input window, operand 1, single buffered']
    #allocation6 [shape = 's32[1]{0}', space=sflag, size = 0x4, scoped, tag = 'scoped memory for tpu_custom_call.1']
    #allocation7 [shape = 'u8[32768]{0}', space=vmem, size = 0x8000, scoped, tag = 'input window, operand 3, single buffered']
    #allocation8 [shape = 'u8[16384]{0}', space=vmem, size = 0x4000, scoped, tag = 'output window, operand 0']
    %10 = vsyncpa [#allocation3], 0
    %s11 = scalar_lea.sflag [#allocation3], 1
    %12 = vsyncpa %s11, 0
    %13 = vsyncpa [#allocation6], 0
    %14 = vsyncpa [#allocation4], 0
    %s15 = scalar_lea.sflag [#allocation4], 1
    %16 = vsyncpa %s15, 0
    loop: start=0, step=1, limit=4
    $region2: #{tpu_custom_call.1} parent=1 // loop_pre_header
      _
    $region3: #{tpu_custom_call.1} parent=1 // loop_header
      %s18 = sphi 0, %s22
      %p19 = scmp.ge.s32.totalorder %s18, 4
      %s28 = sphi 0, %s30
      %s31 = sphi 0, %s28
      %s32 = sphi 0, %s31
      %s48 = sphi 0, %s32
      %s52 = sphi 0, %s52
      %s54 = sphi 0, %s52
      %s55 = sphi 0, %s54
      %s69 = sphi 0, %s55
      %s73 = sphi 0, %s73
      %s75 = sphi 0, %s73
      %s76 = sphi 0, %s75
      %s90 = sphi 0, %s76
      %s94 = sphi 0, %s94
      %s96 = sphi 0, %s94
      %s97 = sphi 0, %s96
      %s111 = sphi 0, %s97
      %s115 = sphi 0, %s115
      %s117 = sphi 0, %s115
      %s118 = sphi 0, %s117
      %s132 = sphi 0, %s118
      %s138 = sphi 0, %s140
      %s141 = sphi 0, %s138
      %s142 = sphi 0, %s141
      %s158 = sphi 0, %s142
    $region4: #{tpu_custom_call.1} parent=1 // loop_header_branch
      %21 = sbr.rel (%p19) target = $region8
    $region5: #{tpu_custom_call.1} parent=1 // loop_body
      %s23 = ssub.s32 %s18, 1
      %s24 = ssub.s32 %s18, 2
      %s25 = sadd.s32 %s18, 1
      %s26 = ssub.s32 %s18, %s25
      %p27 = scmp.eq.s32.totalorder %s26, 0
      %s29 = sadd.s32 %s28, 1
      %s30 = scalar_select %p27, %s28, %s29
      %p33 = pneg %p27
      %p34 = scmp.eq.s32.totalorder %s18, 1
      %p35 = por %p33, %p34
      %p36 = scmp.ne.s32.totalorder %s28, %s31
      %p37 = scmp.eq.s32.totalorder %s18, 0
      %p38 = por %p36, %p37
      %p39 = scmp.ne.s32.totalorder %s28, %s31
      %p40 = scmp.eq.s32.totalorder %s23, 1
      %p41 = por %p39, %p40
      %p42 = scmp.ne.s32.totalorder %s31, %s32
      %p43 = scmp.eq.s32.totalorder %s23, 0
      %p44 = por %p42, %p43
      %p45 = scmp.ne.s32.totalorder %s31, %s32
      %p46 = scmp.eq.s32.totalorder %s24, 1
      %p47 = por %p45, %p46
      %p49 = scmp.ne.s32.totalorder %s32, %s48
      %p50 = scmp.eq.s32.totalorder %s24, 0
      %p51 = por %p49, %p50
      %s53 = sadd.s32 %s52, 1
      %p56 = scmp.eq.s32.totalorder %s18, 1
      %p57 = scmp.ne.s32.totalorder %s52, %s54
      %p58 = scmp.eq.s32.totalorder %s18, 0
      %p59 = por %p57, %p58
      %p60 = scmp.ne.s32.totalorder %s52, %s54
      %p61 = scmp.eq.s32.totalorder %s23, 1
      %p62 = por %p60, %p61
      %p63 = scmp.ne.s32.totalorder %s54, %s55
      %p64 = scmp.eq.s32.totalorder %s23, 0
      %p65 = por %p63, %p64
      %p66 = scmp.ne.s32.totalorder %s54, %s55
      %p67 = scmp.eq.s32.totalorder %s24, 1
      %p68 = por %p66, %p67
      %p70 = scmp.ne.s32.totalorder %s55, %s69
      %p71 = scmp.eq.s32.totalorder %s24, 0
      %p72 = por %p70, %p71
      %s74 = sadd.s32 %s73, 1
      %p77 = scmp.eq.s32.totalorder %s18, 1
      %p78 = scmp.ne.s32.totalorder %s73, %s75
      %p79 = scmp.eq.s32.totalorder %s18, 0
      %p80 = por %p78, %p79
      %p81 = scmp.ne.s32.totalorder %s73, %s75
      %p82 = scmp.eq.s32.totalorder %s23, 1
      %p83 = por %p81, %p82
      %p84 = scmp.ne.s32.totalorder %s75, %s76
      %p85 = scmp.eq.s32.totalorder %s23, 0
      %p86 = por %p84, %p85
      %p87 = scmp.ne.s32.totalorder %s75, %s76
      %p88 = scmp.eq.s32.totalorder %s24, 1
      %p89 = por %p87, %p88
      %p91 = scmp.ne.s32.totalorder %s76, %s90
      %p92 = scmp.eq.s32.totalorder %s24, 0
      %p93 = por %p91, %p92
      %s95 = sadd.s32 %s94, 1
      %p98 = scmp.eq.s32.totalorder %s18, 1
      %p99 = scmp.ne.s32.totalorder %s94, %s96
      %p100 = scmp.eq.s32.totalorder %s18, 0
      %p101 = por %p99, %p100
      %p102 = scmp.ne.s32.totalorder %s94, %s96
      %p103 = scmp.eq.s32.totalorder %s23, 1
      %p104 = por %p102, %p103
      %p105 = scmp.ne.s32.totalorder %s96, %s97
      %p106 = scmp.eq.s32.totalorder %s23, 0
      %p107 = por %p105, %p106
      %p108 = scmp.ne.s32.totalorder %s96, %s97
      %p109 = scmp.eq.s32.totalorder %s24, 1
      %p110 = por %p108, %p109
      %p112 = scmp.ne.s32.totalorder %s97, %s111
      %p113 = scmp.eq.s32.totalorder %s24, 0
      %p114 = por %p112, %p113
      %s116 = sadd.s32 %s115, 1
      %p119 = scmp.eq.s32.totalorder %s18, 1
      %p120 = scmp.ne.s32.totalorder %s115, %s117
      %p121 = scmp.eq.s32.totalorder %s18, 0
      %p122 = por %p120, %p121
      %p123 = scmp.ne.s32.totalorder %s115, %s117
      %p124 = scmp.eq.s32.totalorder %s23, 1
      %p125 = por %p123, %p124
      %p126 = scmp.ne.s32.totalorder %s117, %s118
      %p127 = scmp.eq.s32.totalorder %s23, 0
      %p128 = por %p126, %p127
      %p129 = scmp.ne.s32.totalorder %s117, %s118
      %p130 = scmp.eq.s32.totalorder %s24, 1
      %p131 = por %p129, %p130
      %p133 = scmp.ne.s32.totalorder %s118, %s132
      %p134 = scmp.eq.s32.totalorder %s24, 0
      %p135 = por %p133, %p134
      %s136 = ssub.s32 %s18, %s25
      %p137 = scmp.eq.s32.totalorder %s136, 0
      %s139 = sadd.s32 %s138, 1
      %s140 = scalar_select %p137, %s138, %s139
      %p143 = pneg %p137
      %p144 = scmp.eq.s32.totalorder %s18, 1
      %p145 = por %p143, %p144
      %p146 = scmp.ne.s32.totalorder %s138, %s141
      %p147 = scmp.eq.s32.totalorder %s18, 0
      %p148 = por %p146, %p147
      %p149 = scmp.ne.s32.totalorder %s138, %s141
      %p150 = scmp.eq.s32.totalorder %s23, 1
      %p151 = por %p149, %p150
      %p152 = scmp.ne.s32.totalorder %s141, %s142
      %p153 = scmp.eq.s32.totalorder %s23, 0
      %p154 = por %p152, %p153
      %p155 = scmp.ne.s32.totalorder %s141, %s142
      %p156 = scmp.eq.s32.totalorder %s24, 1
      %p157 = por %p155, %p156
      %p159 = scmp.ne.s32.totalorder %s142, %s158
      %p160 = scmp.eq.s32.totalorder %s24, 0
      %p161 = por %p159, %p160
      %p162 = scmp.le.s32.totalorder 1, %s18
      %p163 = scmp.lt.s32.totalorder %s18, 3
      %p164 = pnand %p162, %p163
      %p165 = pneg %p164
      // Predicated region
      $region9: #{tpu_custom_call.1} parent=5 // pred_check
        _
      $region10: #{tpu_custom_call.1} parent=5 // pred_check_branch
        %167 = sbr.rel (%p164) target = $region12
      $region11: #{tpu_custom_call.1} parent=5 // pred_region
        %s168 = ssub.s32 %s18, 1
        // Predicated region
        $region13: #{tpu_custom_call.1} parent=11 // pred_check
          %p169 = pneg %p65
        $region14: #{tpu_custom_call.1} parent=11 // pred_check_branch
          %171 = sbr.rel (%p169) target = $region16
        $region15: #{tpu_custom_call.1} parent=11 // pred_region
          %s173 = ssub.s32 3072, 3072
          %174 = vsyncadd [#allocation6], %s173
          %s175 = sshll.u32 [#allocation5], 4
          %s176 = int_to_ptr.vmem [resolvable:$true] %s175
          %181 = dma.hbm_to_vmem [thread:$0]  %s1, 3072, %s176, [#allocation6], 192, 192, 12
        $region16: #{tpu_custom_call.1} parent=11 // pred_fallthru
          _
        // Predicated region
        $region17: #{tpu_custom_call.1} parent=11 // pred_check
          %p182 = pneg %p86
        $region18: #{tpu_custom_call.1} parent=11 // pred_check_branch
          %184 = sbr.rel (%p182) target = $region20
        $region19: #{tpu_custom_call.1} parent=11 // pred_region
          _
        $region20: #{tpu_custom_call.1} parent=11 // pred_fallthru
          _
        // Predicated region
        $region21: #{tpu_custom_call.1} parent=11 // pred_check
          %p185 = pneg %p107
        $region22: #{tpu_custom_call.1} parent=11 // pred_check_branch
          %187 = sbr.rel (%p185) target = $region24
        $region23: #{tpu_custom_call.1} parent=11 // pred_region
          %s189 = ssub.s32 1024, 1024
          %190 = vsyncadd [#allocation6], %s189
          %s191 = sshll.u32 [#allocation7], 4
          %s192 = int_to_ptr.vmem [resolvable:$true] %s191
          %197 = dma.hbm_to_vmem [thread:$0]  %s3, 1024, %s192, [#allocation6], 64, 64, 4
        $region24: #{tpu_custom_call.1} parent=11 // pred_fallthru
          _
        // Predicated region
        $region25: #{tpu_custom_call.1} parent=11 // pred_check
          %p198 = pneg %p128
        $region26: #{tpu_custom_call.1} parent=11 // pred_check_branch
          %200 = sbr.rel (%p198) target = $region28
        $region27: #{tpu_custom_call.1} parent=11 // pred_region
          _
        $region28: #{tpu_custom_call.1} parent=11 // pred_fallthru
          _
      $region12: #{tpu_custom_call.1} parent=5 // pred_fallthru
        _
      %p201 = scmp.lt.s32.totalorder %s18, 2
      // Predicated region
      $region29: #{tpu_custom_call.1} parent=5 // pred_check
        %p202 = pneg %p201
      $region30: #{tpu_custom_call.1} parent=5 // pred_check_branch
        %204 = sbr.rel (%p202) target = $region32
      $region31: #{tpu_custom_call.1} parent=5 // pred_region
        // Predicated region
        $region33: #{tpu_custom_call.1} parent=31 // pred_check
          %p205 = pneg %p38
        $region34: #{tpu_custom_call.1} parent=31 // pred_check_branch
          %207 = sbr.rel (%p205) target = $region36
        $region35: #{tpu_custom_call.1} parent=31 // pred_region
          %s208 = sand.u32 %s28, 1
          %s209 = scalar_lea.sflag [#allocation3], %s208
          %s210 = sand.u32 %s28, 1
          %s211 = smul.addr %s210, 16
          %s212 = scalar_lea.vmem [#allocation2], %s211
          %s214 = ssub.s32 256, 256
          %215 = vsyncadd %s209, %s214
          %s216 = smul.addr %s18, 2
          %s217 = smul.addr %s216, 128
          %s218 = scalar_lea.hbm %s0, %s217
          %s219 = sshll.u32 %s212, 4
          %s220 = int_to_ptr.vmem [resolvable:$true] %s219
          %225 = dma.hbm_to_vmem [thread:$0]  %s218, 256, %s220, %s209, 128, 128, 8
        $region36: #{tpu_custom_call.1} parent=31 // pred_fallthru
          _
      $region32: #{tpu_custom_call.1} parent=5 // pred_fallthru
        _
      %p226 = scmp.le.s32.totalorder 1, %s18
      %p227 = scmp.lt.s32.totalorder %s18, 3
      %p228 = pnand %p226, %p227
      %p229 = pneg %p228
      // Predicated region
      $region37: #{tpu_custom_call.1} parent=5 // pred_check
        _
      $region38: #{tpu_custom_call.1} parent=5 // pred_check_branch
        %231 = sbr.rel (%p228) target = $region40
      $region39: #{tpu_custom_call.1} parent=5 // pred_region
        %s232 = ssub.s32 %s18, 1
        %s233 = sand.u32 %s31, 1
        %s234 = scalar_lea.sflag [#allocation3], %s233
        %s235 = sand.u32 %s31, 1
        %s236 = smul.addr %s235, 16
        %s237 = scalar_lea.vmem [#allocation2], %s236
        // Predicated region
        $region41: #{tpu_custom_call.1} parent=39 // pred_check
          %p238 = pneg %p44
        $region42: #{tpu_custom_call.1} parent=39 // pred_check_branch
          %240 = sbr.rel (%p238) target = $region44
        $region43: #{tpu_custom_call.1} parent=39 // pred_region
          %241 = dma.done %s234, 256
        $region44: #{tpu_custom_call.1} parent=39 // pred_fallthru
          _
        // Predicated region
        $region45: #{tpu_custom_call.1} parent=39 // pred_check
          %p242 = pneg %p65
        $region46: #{tpu_custom_call.1} parent=39 // pred_check_branch
          %244 = sbr.rel (%p242) target = $region48
        $region47: #{tpu_custom_call.1} parent=39 // pred_region
          %245 = dma.done [#allocation6], 3072
        $region48: #{tpu_custom_call.1} parent=39 // pred_fallthru
          _
        // Predicated region
        $region49: #{tpu_custom_call.1} parent=39 // pred_check
          %p246 = pneg %p107
        $region50: #{tpu_custom_call.1} parent=39 // pred_check_branch
          %248 = sbr.rel (%p246) target = $region52
        $region51: #{tpu_custom_call.1} parent=39 // pred_region
          %249 = dma.done [#allocation6], 1024
        $region52: #{tpu_custom_call.1} parent=39 // pred_fallthru
          _
        %s250 = sand.u32 %s31, 1
        %s251 = scalar_lea.sflag [#allocation3], %s250
        %s252 = sand.u32 %s31, 1
        %s253 = smul.addr %s252, 16
        %s254 = scalar_lea.vmem [#allocation2], %s253
        %p255 = pneg %p44
        %p256 = pneg %p41
        %p257 = pneg %p65
        %p258 = pneg %p62
        %p259 = pneg %p86
        %p260 = pneg %p83
        %p261 = pneg %p107
        %p262 = pneg %p104
        %p263 = pneg %p128
        %p264 = pneg %p125
        %p265 = pneg %p154
        %p266 = pneg %p151
        %s267 = sand.u32 %s141, 1
        %s268 = scalar_lea.sflag [#allocation4], %s267
        %s269 = sand.u32 %s141, 1
        %s270 = smul.addr %s269, 16
        %s271 = scalar_lea.vmem [#allocation8], %s270
        %v273 = vld [vmem:[%s237] sm:$0xff]
        %v274 = vld [vmem:[%s237 + $0x8] sm:$0xff]
        %v275 = vpack.c.bf16 %v274, %v273
        %v276 = vld [vmem:[#allocation5] sm:$0xff]
        %v277 = vld [vmem:[#allocation5 + $0x8] sm:$0xf]
        %v278 = vld [vmem:[#allocation5 + $0xc] sm:$0xff]
        %v279 = vld [vmem:[#allocation5 + $0x14] sm:$0xf]
        %v280 = vld [vmem:[#allocation5 + $0x18] sm:$0xff]
        %v281 = vld [vmem:[#allocation5 + $0x20] sm:$0xf]
        %v282 = vld [vmem:[#allocation5 + $0x24] sm:$0xff]
        %v283 = vld [vmem:[#allocation5 + $0x2c] sm:$0xf]
        %v284 = vld [vmem:[#allocation5 + $0x30] sm:$0xff]
        %v285 = vld [vmem:[#allocation5 + $0x38] sm:$0xf]
        %v286 = vld [vmem:[#allocation5 + $0x3c] sm:$0xff]
        %v287 = vld [vmem:[#allocation5 + $0x44] sm:$0xf]
        %v288 = vld [vmem:[#allocation5 + $0x48] sm:$0xff]
        %v289 = vld [vmem:[#allocation5 + $0x50] sm:$0xf]
        %v290 = vld [vmem:[#allocation5 + $0x54] sm:$0xff]
        %v291 = vld [vmem:[#allocation5 + $0x5c] sm:$0xf]
        %v292 = vld [vmem:[#allocation5 + $0x60] sm:$0xff]
        %v293 = vld [vmem:[#allocation5 + $0x68] sm:$0xf]
        %v294 = vld [vmem:[#allocation5 + $0x6c] sm:$0xff]
        %v295 = vld [vmem:[#allocation5 + $0x74] sm:$0xf]
        %v296 = vld [vmem:[#allocation5 + $0x78] sm:$0xff]
        %v297 = vld [vmem:[#allocation5 + $0x80] sm:$0xf]
        %v298 = vld [vmem:[#allocation5 + $0x84] sm:$0xff]
        %v299 = vld [vmem:[#allocation5 + $0x8c] sm:$0xf]
        %v300 = vld [vmem:[#allocation5 + $0x90] sm:$0xff]
        %v301 = vld [vmem:[#allocation5 + $0x98] sm:$0xf]
        %v302 = vld [vmem:[#allocation5 + $0x9c] sm:$0xff]
        %v303 = vld [vmem:[#allocation5 + $0xa4] sm:$0xf]
        %v304 = vld [vmem:[#allocation5 + $0xa8] sm:$0xff]
        %v305 = vld [vmem:[#allocation5 + $0xb0] sm:$0xf]
        %v306 = vld [vmem:[#allocation5 + $0xb4] sm:$0xff]
        %v307 = vld [vmem:[#allocation5 + $0xbc] sm:$0xf]
        %v308 = vld [vmem:[%s2] sm:$0x7]
        %v310 = vlaneseq
        %v311 = vshrl.u32 %v310, 7
        %v312 = vsub.s32 0, %v311
        %v313 = vrot.slane %v308, %v312
        %v314 = vlaneseq
        %v315 = vshrl.u32 %v314, 7
        %v316 = vsub.s32 1, %v315
        %v317 = vrot.slane %v308, %v316
        %v318 = vlaneseq
        %v319 = vshrl.u32 %v318, 7
        %v320 = vsub.s32 2, %v319
        %v321 = vrot.slane %v308, %v320
        %v357 = vunpack.c.l.b16 %v276
        %v358 = vunpack.c.h.b16 %v276
        %v359 = vunpack.c.l.b16 %v277
        %v360 = vunpack.c.l.b16 %v278
        %v361 = vunpack.c.h.b16 %v278
        %v362 = vunpack.c.l.b16 %v279
        %v363 = vunpack.c.l.b16 %v280
        %v364 = vunpack.c.h.b16 %v280
        %v365 = vunpack.c.l.b16 %v281
        %v366 = vunpack.c.l.b16 %v282
        %v367 = vunpack.c.h.b16 %v282
        %v368 = vunpack.c.l.b16 %v283
        %v369 = vunpack.c.l.b16 %v284
        %v370 = vunpack.c.h.b16 %v284
        %v371 = vunpack.c.l.b16 %v285
        %v372 = vunpack.c.l.b16 %v286
        %v373 = vunpack.c.h.b16 %v286
        %v374 = vunpack.c.l.b16 %v287
        %v375 = vunpack.c.l.b16 %v288
        %v376 = vunpack.c.h.b16 %v288
        %v377 = vunpack.c.l.b16 %v289
        %v378 = vunpack.c.l.b16 %v290
        %v379 = vunpack.c.h.b16 %v290
        %v380 = vunpack.c.l.b16 %v291
        %v381 = vunpack.c.l.b16 %v292
        %v382 = vunpack.c.h.b16 %v292
        %v383 = vunpack.c.l.b16 %v293
        %v384 = vunpack.c.l.b16 %v294
        %v385 = vunpack.c.h.b16 %v294
        %v386 = vunpack.c.l.b16 %v295
        %v387 = vunpack.c.l.b16 %v296
        %v388 = vunpack.c.h.b16 %v296
        %v389 = vunpack.c.l.b16 %v297
        %v390 = vunpack.c.l.b16 %v298
        %v391 = vunpack.c.h.b16 %v298
        %v392 = vunpack.c.l.b16 %v299
        %v393 = vunpack.c.l.b16 %v300
        %v394 = vunpack.c.h.b16 %v300
        %v395 = vunpack.c.l.b16 %v301
        %v396 = vunpack.c.l.b16 %v302
        %v397 = vunpack.c.h.b16 %v302
        %v398 = vunpack.c.l.b16 %v303
        %v399 = vunpack.c.l.b16 %v304
        %v400 = vunpack.c.h.b16 %v304
        %v401 = vunpack.c.l.b16 %v305
        %v402 = vunpack.c.l.b16 %v306
        %v403 = vunpack.c.h.b16 %v306
        %v404 = vunpack.c.l.b16 %v307
        %v405 = vpack.c.b16 %v360, %v357
        %v406 = vpack.c.b16 %v361, %v358
        %v407 = vpack.c.b16 %v362, %v359
        %v408 = vpack.c.b16 %v366, %v363
        %v409 = vpack.c.b16 %v367, %v364
        %v410 = vpack.c.b16 %v368, %v365
        %v411 = vpack.c.b16 %v372, %v369
        %v412 = vpack.c.b16 %v373, %v370
        %v413 = vpack.c.b16 %v374, %v371
        %v414 = vpack.c.b16 %v378, %v375
        %v415 = vpack.c.b16 %v379, %v376
        %v416 = vpack.c.b16 %v380, %v377
        %v417 = vpack.c.b16 %v384, %v381
        %v418 = vpack.c.b16 %v385, %v382
        %v419 = vpack.c.b16 %v386, %v383
        %v420 = vpack.c.b16 %v390, %v387
        %v421 = vpack.c.b16 %v391, %v388
        %v422 = vpack.c.b16 %v392, %v389
        %v423 = vpack.c.b16 %v396, %v393
        %v424 = vpack.c.b16 %v397, %v394
        %v425 = vpack.c.b16 %v398, %v395
        %v426 = vpack.c.b16 %v402, %v399
        %v427 = vpack.c.b16 %v403, %v400
        %v428 = vpack.c.b16 %v404, %v401
        %453 = vmatprep.subr.bf16.mxu0 %v406
        %454 = vmatpush1.bf16.msra.mxu0 %v405
        %455 = vmatprep.subr.bf16.mxu0 %v409
        %456 = vmatpush1.bf16.msra.mxu0 %v408
        %457 = vmatprep.subr.bf16.mxu0 %v412
        %458 = vmatpush1.bf16.msra.mxu0 %v411
        %459 = vmatprep.subr.bf16.mxu0 %v415
        %460 = vmatpush1.bf16.msra.mxu0 %v414
        %461 = vmatprep.subr.bf16.mxu0 %v418
        %462 = vmatpush1.bf16.msra.mxu0 %v417
        %463 = vmatprep.subr.bf16.mxu0 %v421
        %464 = vmatpush1.bf16.msra.mxu0 %v420
        %465 = vmatprep.subr.bf16.mxu0 %v424
        %466 = vmatpush1.bf16.msra.mxu0 %v423
        %467 = vmatprep.subr.bf16.mxu0 %v427
        %468 = vmatpush1.bf16.msra.mxu0 %v426
        %469 = vmatprep.subr.bf16.mxu0 0
        %470 = vmatpush1.bf16.msra.mxu0 0
        %471 = vmatprep.subr.bf16.mxu0 0
        %472 = vmatpush1.bf16.msra.mxu0 0
        %473 = vmatprep.subr.bf16.mxu0 0
        %474 = vmatpush1.bf16.msra.mxu0 0
        %475 = vmatprep.subr.bf16.mxu0 0
        %476 = vmatpush1.bf16.msra.mxu0 0
        %477 = vmatprep.subr.bf16.mxu0 0
        %478 = vmatpush1.bf16.msra.mxu0 0
        %479 = vmatprep.subr.bf16.mxu0 0
        %480 = vmatpush1.bf16.msra.mxu0 0
        %481 = vmatprep.subr.bf16.mxu0 0
        %482 = vmatpush1.bf16.msra.mxu0 0
        %483 = vmatprep.subr.bf16.mxu0 0
        %484 = vmatpush1.bf16.msra.mxu0 0
        %485 = vmatprep.mubr.bf16.mxu0 0
        %486 = vmatmul.mubr.bf16.gmra.mrb[0].mxu0 %v275
        %v487 = vpop.f32.mrb[0].mxu0
        %v488 = vadd.f32 %v313, %v487
        %v489 = vpop.f32.mrb[0].mxu0
        %v490 = vadd.f32 %v317, %v489
        %v491 = vpop.f32.mrb[0].mxu0
        %v492 = vadd.f32 %v313, %v491
        %v493 = vpop.f32.mrb[0].mxu0
        %v494 = vadd.f32 %v317, %v493
        %495 = vdwg.mxu0
        %496 = vmatprep.subr.bf16.mxu0 0
        %497 = vmatpush1.bf16.msra.mxu0 %v407
        %498 = vmatprep.subr.bf16.mxu0 0
        %499 = vmatpush1.bf16.msra.mxu0 %v410
        %500 = vmatprep.subr.bf16.mxu0 0
        %501 = vmatpush1.bf16.msra.mxu0 %v413
        %502 = vmatprep.subr.bf16.mxu0 0
        %503 = vmatpush1.bf16.msra.mxu0 %v416
        %504 = vmatprep.subr.bf16.mxu0 0
        %505 = vmatpush1.bf16.msra.mxu0 %v419
        %506 = vmatprep.subr.bf16.mxu0 0
        %507 = vmatpush1.bf16.msra.mxu0 %v422
        %508 = vmatprep.subr.bf16.mxu0 0
        %509 = vmatpush1.bf16.msra.mxu0 %v425
        %510 = vmatprep.subr.bf16.mxu0 0
        %511 = vmatpush1.bf16.msra.mxu0 %v428
        %512 = vmatprep.subr.bf16.mxu0 0
        %513 = vmatpush1.bf16.msra.mxu0 0
        %514 = vmatprep.subr.bf16.mxu0 0
        %515 = vmatpush1.bf16.msra.mxu0 0
        %516 = vmatprep.subr.bf16.mxu0 0
        %517 = vmatpush1.bf16.msra.mxu0 0
        %518 = vmatprep.subr.bf16.mxu0 0
        %519 = vmatpush1.bf16.msra.mxu0 0
        %520 = vmatprep.subr.bf16.mxu0 0
        %521 = vmatpush1.bf16.msra.mxu0 0
        %522 = vmatprep.subr.bf16.mxu0 0
        %523 = vmatpush1.bf16.msra.mxu0 0
        %524 = vmatprep.subr.bf16.mxu0 0
        %525 = vmatpush1.bf16.msra.mxu0 0
        %526 = vmatprep.subr.bf16.mxu0 0
        %527 = vmatpush1.bf16.msra.mxu0 0
        %528 = vmatprep.mubr.bf16.mxu0 0
        %529 = vmatmul.mubr.bf16.gmra.mrb[0].mxu0 %v275
        %v530 = vpop.f32.mrb[0].mxu0
        %v531 = vadd.f32 %v321, %v530
        %v532 = vpop.f32.mrb[0].mxu0
        %v533 = vpop.f32.mrb[0].mxu0
        %v534 = vadd.f32 %v321, %v533
        %v535 = vpop.f32.mrb[0].mxu0
        %536 = vdwg.mxu0
        %v537 = vmul.f32 %v488, 0.17677669
        %v538 = vmul.f32 %v492, 0.17677669
        %v539 = vpack.c.bf16 %v538, %v537
        %v540 = vpack.c.bf16 %v494, %v490
        %v541 = vpack.c.bf16 %v534, %v531
        %vm542 = vcmask 261120
        %v544 = vsel %vm542, %v539, 0
        %v547 = vsel %vm542, %v540, 0
        %549 = vmatprep.subr.bf16.mxu0 0
        %550 = vmatpush1.bf16.xpose.msra.mxu0 %v547
        %551 = vmatprep.subr.bf16.mxu0 0
        %552 = vmatpush1.bf16.xpose.msra.mxu0 0
        %553 = vmatprep.subr.bf16.mxu0 0
        %554 = vmatpush1.bf16.xpose.msra.mxu0 0
        %555 = vmatprep.subr.bf16.mxu0 0
        %556 = vmatpush1.bf16.xpose.msra.mxu0 0
        %557 = vmatprep.subr.bf16.mxu0 0
        %558 = vmatpush1.bf16.xpose.msra.mxu0 0
        %559 = vmatprep.subr.bf16.mxu0 0
        %560 = vmatpush1.bf16.xpose.msra.mxu0 0
        %561 = vmatprep.subr.bf16.mxu0 0
        %562 = vmatpush1.bf16.xpose.msra.mxu0 0
        %563 = vmatprep.subr.bf16.mxu0 0
        %564 = vmatpush1.bf16.xpose.msra.mxu0 0
        %565 = vmatprep.subr.bf16.mxu0 0
        %566 = vmatpush1.bf16.xpose.msra.mxu0 0
        %567 = vmatprep.subr.bf16.mxu0 0
        %568 = vmatpush1.bf16.xpose.msra.mxu0 0
        %569 = vmatprep.subr.bf16.mxu0 0
        %570 = vmatpush1.bf16.xpose.msra.mxu0 0
        %571 = vmatprep.subr.bf16.mxu0 0
        %572 = vmatpush1.bf16.xpose.msra.mxu0 0
        %573 = vmatprep.subr.bf16.mxu0 0
        %574 = vmatpush1.bf16.xpose.msra.mxu0 0
        %575 = vmatprep.subr.bf16.mxu0 0
        %576 = vmatpush1.bf16.xpose.msra.mxu0 0
        %577 = vmatprep.subr.bf16.mxu0 0
        %578 = vmatpush1.bf16.xpose.msra.mxu0 0
        %579 = vmatprep.subr.bf16.mxu0 0
        %580 = vmatpush1.bf16.xpose.msra.mxu0 0
        %581 = vmatprep.mubr.bf16.mxu0 0
        %582 = vmatmul.mubr.bf16.gmra.mrb[0].mxu0 %v544
        %v583 = vpop.f32.mrb[0].mxu0
        %v584 = vadd.f32 0.0, %v583
        %v585 = vpop.f32.mrb[0].mxu0
        %v586 = vpop.f32.mrb[0].mxu0
        %v587 = vadd.f32 0.0, %v586
        %v588 = vpop.f32.mrb[0].mxu0
        %589 = vdwg.mxu0
        %vm590 = vcmask 130048
        %v591 = vsel %vm590, %v584, -inf
        %592 = vmax.xlane.f32.xlu0 %v591
        %v593 = vpop.xlane.xlu0 %592
        %v594 = vsel %vm590, %v587, -inf
        %595 = vmax.xlane.f32.xlu0 %v594
        %v596 = vpop.xlane.xlu0 %595
        %v597 = vsub.f32 %v584, %v593
        %v598 = vsub.f32 %v587, %v596
        %v599 = vmul.f32 %v597, 1.442695
        %v600 = vpow.pop %v599
        %v601 = vmul.f32 %v598, 1.442695
        %v602 = vpow.pop %v601
        %v603 = vsel %vm590, %v600, 0.0
        %604 = vadd.xlane.f32.xlu0 %v603
        %v605 = vpop.xlane.xlu0 %604
        %v606 = vsel %vm590, %v602, 0.0
        %607 = vadd.xlane.f32.xlu0 %v606
        %v608 = vpop.xlane.xlu0 %607
        %v609 = vpack.c.bf16 %v602, %v600
        %v611 = vsel %vm590, %v609, 0
        %613 = vmatprep.subr.bf16.mxu0 0
        %614 = vmatpush1.bf16.msra.mxu0 %v541
        %615 = vmatprep.subr.bf16.mxu0 0
        %616 = vmatpush1.bf16.msra.mxu0 0
        %617 = vmatprep.subr.bf16.mxu0 0
        %618 = vmatpush1.bf16.msra.mxu0 0
        %619 = vmatprep.subr.bf16.mxu0 0
        %620 = vmatpush1.bf16.msra.mxu0 0
        %621 = vmatprep.subr.bf16.mxu0 0
        %622 = vmatpush1.bf16.msra.mxu0 0
        %623 = vmatprep.subr.bf16.mxu0 0
        %624 = vmatpush1.bf16.msra.mxu0 0
        %625 = vmatprep.subr.bf16.mxu0 0
        %626 = vmatpush1.bf16.msra.mxu0 0
        %627 = vmatprep.subr.bf16.mxu0 0
        %628 = vmatpush1.bf16.msra.mxu0 0
        %629 = vmatprep.subr.bf16.mxu0 0
        %630 = vmatpush1.bf16.msra.mxu0 0
        %631 = vmatprep.subr.bf16.mxu0 0
        %632 = vmatpush1.bf16.msra.mxu0 0
        %633 = vmatprep.subr.bf16.mxu0 0
        %634 = vmatpush1.bf16.msra.mxu0 0
        %635 = vmatprep.subr.bf16.mxu0 0
        %636 = vmatpush1.bf16.msra.mxu0 0
        %637 = vmatprep.subr.bf16.mxu0 0
        %638 = vmatpush1.bf16.msra.mxu0 0
        %639 = vmatprep.subr.bf16.mxu0 0
        %640 = vmatpush1.bf16.msra.mxu0 0
        %641 = vmatprep.subr.bf16.mxu0 0
        %642 = vmatpush1.bf16.msra.mxu0 0
        %643 = vmatprep.subr.bf16.mxu0 0
        %644 = vmatpush1.bf16.msra.mxu0 0
        %645 = vmatprep.mubr.bf16.mxu0 0
        %646 = vmatmul.mubr.bf16.gmra.mrb[0].mxu0 %v611
        %v647 = vpop.f32.mrb[0].mxu0
        %v648 = vadd.f32 0.0, %v647
        %v649 = vpop.f32.mrb[0].mxu0
        %v650 = vpop.f32.mrb[0].mxu0
        %v651 = vadd.f32 0.0, %v650
        %v652 = vpop.f32.mrb[0].mxu0
        %653 = vdwg.mxu0
        %v654 = vrcp.pop %v605
        %v655 = vrcp.pop %v608
        %v656 = vmul.f32 %v648, %v654
        %v657 = vmul.f32 %v651, %v655
        %659 = vrot.lane.b32.xlu0 %v539, 96
        %v660 = vpop.permute.xlu0 %659
        %662 = vrot.lane.b32.xlu0 %v540, 96
        %v663 = vpop.permute.xlu0 %662
        %v665 = vsel %vm542, %v660, 0
        %v668 = vsel %vm542, %v663, 0
        %670 = vmatprep.subr.bf16.mxu0 0
        %671 = vmatpush1.bf16.xpose.msra.mxu0 %v668
        %672 = vmatprep.subr.bf16.mxu0 0
        %673 = vmatpush1.bf16.xpose.msra.mxu0 0
        %674 = vmatprep.subr.bf16.mxu0 0
        %675 = vmatpush1.bf16.xpose.msra.mxu0 0
        %676 = vmatprep.subr.bf16.mxu0 0
        %677 = vmatpush1.bf16.xpose.msra.mxu0 0
        %678 = vmatprep.subr.bf16.mxu0 0
        %679 = vmatpush1.bf16.xpose.msra.mxu0 0
        %680 = vmatprep.subr.bf16.mxu0 0
        %681 = vmatpush1.bf16.xpose.msra.mxu0 0
        %682 = vmatprep.subr.bf16.mxu0 0
        %683 = vmatpush1.bf16.xpose.msra.mxu0 0
        %684 = vmatprep.subr.bf16.mxu0 0
        %685 = vmatpush1.bf16.xpose.msra.mxu0 0
        %686 = vmatprep.subr.bf16.mxu0 0
        %687 = vmatpush1.bf16.xpose.msra.mxu0 0
        %688 = vmatprep.subr.bf16.mxu0 0
        %689 = vmatpush1.bf16.xpose.msra.mxu0 0
        %690 = vmatprep.subr.bf16.mxu0 0
        %691 = vmatpush1.bf16.xpose.msra.mxu0 0
        %692 = vmatprep.subr.bf16.mxu0 0
        %693 = vmatpush1.bf16.xpose.msra.mxu0 0
        %694 = vmatprep.subr.bf16.mxu0 0
        %695 = vmatpush1.bf16.xpose.msra.mxu0 0
        %696 = vmatprep.subr.bf16.mxu0 0
        %697 = vmatpush1.bf16.xpose.msra.mxu0 0
        %698 = vmatprep.subr.bf16.mxu0 0
        %699 = vmatpush1.bf16.xpose.msra.mxu0 0
        %700 = vmatprep.subr.bf16.mxu0 0
        %701 = vmatpush1.bf16.xpose.msra.mxu0 0
        %702 = vmatprep.mubr.bf16.mxu0 0
        %703 = vmatmul.mubr.bf16.gmra.mrb[0].mxu0 %v665
        %v704 = vpop.f32.mrb[0].mxu0
        %v705 = vadd.f32 0.0, %v704
        %v706 = vpop.f32.mrb[0].mxu0
        %v707 = vpop.f32.mrb[0].mxu0
        %v708 = vadd.f32 0.0, %v707
        %v709 = vpop.f32.mrb[0].mxu0
        %710 = vdwg.mxu0
        %v711 = vsel %vm590, %v705, -inf
        %712 = vmax.xlane.f32.xlu0 %v711
        %v713 = vpop.xlane.xlu0 %712
        %v714 = vsel %vm590, %v708, -inf
        %715 = vmax.xlane.f32.xlu0 %v714
        %v716 = vpop.xlane.xlu0 %715
        %v717 = vsub.f32 %v705, %v713
        %v718 = vsub.f32 %v708, %v716
        %v719 = vmul.f32 %v717, 1.442695
        %v720 = vpow.pop %v719
        %v721 = vmul.f32 %v718, 1.442695
        %v722 = vpow.pop %v721
        %v723 = vsel %vm590, %v720, 0.0
        %724 = vadd.xlane.f32.xlu0 %v723
        %v725 = vpop.xlane.xlu0 %724
        %v726 = vsel %vm590, %v722, 0.0
        %727 = vadd.xlane.f32.xlu0 %v726
        %v728 = vpop.xlane.xlu0 %727
        %v729 = vpack.c.bf16 %v722, %v720
        %731 = vrot.lane.b32.xlu0 %v541, 96
        %v732 = vpop.permute.xlu0 %731
        %v735 = vsel %vm590, %v729, 0
        %737 = vmatprep.subr.bf16.mxu0 0
        %738 = vmatpush1.bf16.msra.mxu0 %v732
        %739 = vmatprep.subr.bf16.mxu0 0
        %740 = vmatpush1.bf16.msra.mxu0 0
        %741 = vmatprep.subr.bf16.mxu0 0
        %742 = vmatpush1.bf16.msra.mxu0 0
        %743 = vmatprep.subr.bf16.mxu0 0
        %744 = vmatpush1.bf16.msra.mxu0 0
        %745 = vmatprep.subr.bf16.mxu0 0
        %746 = vmatpush1.bf16.msra.mxu0 0
        %747 = vmatprep.subr.bf16.mxu0 0
        %748 = vmatpush1.bf16.msra.mxu0 0
        %749 = vmatprep.subr.bf16.mxu0 0
        %750 = vmatpush1.bf16.msra.mxu0 0
        %751 = vmatprep.subr.bf16.mxu0 0
        %752 = vmatpush1.bf16.msra.mxu0 0
        %753 = vmatprep.subr.bf16.mxu0 0
        %754 = vmatpush1.bf16.msra.mxu0 0
        %755 = vmatprep.subr.bf16.mxu0 0
        %756 = vmatpush1.bf16.msra.mxu0 0
        %757 = vmatprep.subr.bf16.mxu0 0
        %758 = vmatpush1.bf16.msra.mxu0 0
        %759 = vmatprep.subr.bf16.mxu0 0
        %760 = vmatpush1.bf16.msra.mxu0 0
        %761 = vmatprep.subr.bf16.mxu0 0
        %762 = vmatpush1.bf16.msra.mxu0 0
        %763 = vmatprep.subr.bf16.mxu0 0
        %764 = vmatpush1.bf16.msra.mxu0 0
        %765 = vmatprep.subr.bf16.mxu0 0
        %766 = vmatpush1.bf16.msra.mxu0 0
        %767 = vmatprep.subr.bf16.mxu0 0
        %768 = vmatpush1.bf16.msra.mxu0 0
        %769 = vmatprep.mubr.bf16.mxu0 0
        %770 = vmatmul.mubr.bf16.gmra.mrb[0].mxu0 %v735
        %v771 = vpop.f32.mrb[0].mxu0
        %v772 = vadd.f32 0.0, %v771
        %v773 = vpop.f32.mrb[0].mxu0
        %v774 = vpop.f32.mrb[0].mxu0
        %v775 = vadd.f32 0.0, %v774
        %v776 = vpop.f32.mrb[0].mxu0
        %777 = vdwg.mxu0
        %v778 = vrcp.pop %v725
        %v779 = vrcp.pop %v728
        %v780 = vmul.f32 %v772, %v778
        %v781 = vmul.f32 %v775, %v779
        %782 = vrot.lane.b32.xlu0 %v539, 64
        %v783 = vpop.permute.xlu0 %782
        %784 = vrot.lane.b32.xlu0 %v540, 64
        %v785 = vpop.permute.xlu0 %784
        %v787 = vsel %vm542, %v783, 0
        %v790 = vsel %vm542, %v785, 0
        %792 = vmatprep.subr.bf16.mxu0 0
        %793 = vmatpush1.bf16.xpose.msra.mxu0 %v790
        %794 = vmatprep.subr.bf16.mxu0 0
        %795 = vmatpush1.bf16.xpose.msra.mxu0 0
        %796 = vmatprep.subr.bf16.mxu0 0
        %797 = vmatpush1.bf16.xpose.msra.mxu0 0
        %798 = vmatprep.subr.bf16.mxu0 0
        %799 = vmatpush1.bf16.xpose.msra.mxu0 0
        %800 = vmatprep.subr.bf16.mxu0 0
        %801 = vmatpush1.bf16.xpose.msra.mxu0 0
        %802 = vmatprep.subr.bf16.mxu0 0
        %803 = vmatpush1.bf16.xpose.msra.mxu0 0
        %804 = vmatprep.subr.bf16.mxu0 0
        %805 = vmatpush1.bf16.xpose.msra.mxu0 0
        %806 = vmatprep.subr.bf16.mxu0 0
        %807 = vmatpush1.bf16.xpose.msra.mxu0 0
        %808 = vmatprep.subr.bf16.mxu0 0
        %809 = vmatpush1.bf16.xpose.msra.mxu0 0
        %810 = vmatprep.subr.bf16.mxu0 0
        %811 = vmatpush1.bf16.xpose.msra.mxu0 0
        %812 = vmatprep.subr.bf16.mxu0 0
        %813 = vmatpush1.bf16.xpose.msra.mxu0 0
        %814 = vmatprep.subr.bf16.mxu0 0
        %815 = vmatpush1.bf16.xpose.msra.mxu0 0
        %816 = vmatprep.subr.bf16.mxu0 0
        %817 = vmatpush1.bf16.xpose.msra.mxu0 0
        %818 = vmatprep.subr.bf16.mxu0 0
        %819 = vmatpush1.bf16.xpose.msra.mxu0 0
        %820 = vmatprep.subr.bf16.mxu0 0
        %821 = vmatpush1.bf16.xpose.msra.mxu0 0
        %822 = vmatprep.subr.bf16.mxu0 0
        %823 = vmatpush1.bf16.xpose.msra.mxu0 0
        %824 = vmatprep.mubr.bf16.mxu0 0
        %825 = vmatmul.mubr.bf16.gmra.mrb[0].mxu0 %v787
        %v826 = vpop.f32.mrb[0].mxu0
        %v827 = vadd.f32 0.0, %v826
        %v828 = vpop.f32.mrb[0].mxu0
        %v829 = vpop.f32.mrb[0].mxu0
        %v830 = vadd.f32 0.0, %v829
        %v831 = vpop.f32.mrb[0].mxu0
        %832 = vdwg.mxu0
        %v833 = vsel %vm590, %v827, -inf
        %834 = vmax.xlane.f32.xlu0 %v833
        %v835 = vpop.xlane.xlu0 %834
        %v836 = vsel %vm590, %v830, -inf
        %837 = vmax.xlane.f32.xlu0 %v836
        %v838 = vpop.xlane.xlu0 %837
        %v839 = vsub.f32 %v827, %v835
        %v840 = vsub.f32 %v830, %v838
        %v841 = vmul.f32 %v839, 1.442695
        %v842 = vpow.pop %v841
        %v843 = vmul.f32 %v840, 1.442695
        %v844 = vpow.pop %v843
        %v845 = vsel %vm590, %v842, 0.0
        %846 = vadd.xlane.f32.xlu0 %v845
        %v847 = vpop.xlane.xlu0 %846
        %v848 = vsel %vm590, %v844, 0.0
        %849 = vadd.xlane.f32.xlu0 %v848
        %v850 = vpop.xlane.xlu0 %849
        %v851 = vpack.c.bf16 %v844, %v842
        %852 = vrot.lane.b32.xlu0 %v541, 64
        %v853 = vpop.permute.xlu0 %852
        %v856 = vsel %vm590, %v851, 0
        %858 = vmatprep.subr.bf16.mxu0 0
        %859 = vmatpush1.bf16.msra.mxu0 %v853
        %860 = vmatprep.subr.bf16.mxu0 0
        %861 = vmatpush1.bf16.msra.mxu0 0
        %862 = vmatprep.subr.bf16.mxu0 0
        %863 = vmatpush1.bf16.msra.mxu0 0
        %864 = vmatprep.subr.bf16.mxu0 0
        %865 = vmatpush1.bf16.msra.mxu0 0
        %866 = vmatprep.subr.bf16.mxu0 0
        %867 = vmatpush1.bf16.msra.mxu0 0
        %868 = vmatprep.subr.bf16.mxu0 0
        %869 = vmatpush1.bf16.msra.mxu0 0
        %870 = vmatprep.subr.bf16.mxu0 0
        %871 = vmatpush1.bf16.msra.mxu0 0
        %872 = vmatprep.subr.bf16.mxu0 0
        %873 = vmatpush1.bf16.msra.mxu0 0
        %874 = vmatprep.subr.bf16.mxu0 0
        %875 = vmatpush1.bf16.msra.mxu0 0
        %876 = vmatprep.subr.bf16.mxu0 0
        %877 = vmatpush1.bf16.msra.mxu0 0
        %878 = vmatprep.subr.bf16.mxu0 0
        %879 = vmatpush1.bf16.msra.mxu0 0
        %880 = vmatprep.subr.bf16.mxu0 0
        %881 = vmatpush1.bf16.msra.mxu0 0
        %882 = vmatprep.subr.bf16.mxu0 0
        %883 = vmatpush1.bf16.msra.mxu0 0
        %884 = vmatprep.subr.bf16.mxu0 0
        %885 = vmatpush1.bf16.msra.mxu0 0
        %886 = vmatprep.subr.bf16.mxu0 0
        %887 = vmatpush1.bf16.msra.mxu0 0
        %888 = vmatprep.subr.bf16.mxu0 0
        %889 = vmatpush1.bf16.msra.mxu0 0
        %890 = vmatprep.mubr.bf16.mxu0 0
        %891 = vmatmul.mubr.bf16.gmra.mrb[0].mxu0 %v856
        %v892 = vpop.f32.mrb[0].mxu0
        %v893 = vadd.f32 0.0, %v892
        %v894 = vpop.f32.mrb[0].mxu0
        %v895 = vpop.f32.mrb[0].mxu0
        %v896 = vadd.f32 0.0, %v895
        %v897 = vpop.f32.mrb[0].mxu0
        %898 = vdwg.mxu0
        %v899 = vrcp.pop %v847
        %v900 = vrcp.pop %v850
        %v901 = vmul.f32 %v893, %v899
        %v902 = vmul.f32 %v896, %v900
        %903 = vrot.lane.b32.xlu0 %v539, 32
        %v904 = vpop.permute.xlu0 %903
        %905 = vrot.lane.b32.xlu0 %v540, 32
        %v906 = vpop.permute.xlu0 %905
        %v908 = vsel %vm542, %v904, 0
        %v911 = vsel %vm542, %v906, 0
        %913 = vmatprep.subr.bf16.mxu0 0
        %914 = vmatpush1.bf16.xpose.msra.mxu0 %v911
        %915 = vmatprep.subr.bf16.mxu0 0
        %916 = vmatpush1.bf16.xpose.msra.mxu0 0
        %917 = vmatprep.subr.bf16.mxu0 0
        %918 = vmatpush1.bf16.xpose.msra.mxu0 0
        %919 = vmatprep.subr.bf16.mxu0 0
        %920 = vmatpush1.bf16.xpose.msra.mxu0 0
        %921 = vmatprep.subr.bf16.mxu0 0
        %922 = vmatpush1.bf16.xpose.msra.mxu0 0
        %923 = vmatprep.subr.bf16.mxu0 0
        %924 = vmatpush1.bf16.xpose.msra.mxu0 0
        %925 = vmatprep.subr.bf16.mxu0 0
        %926 = vmatpush1.bf16.xpose.msra.mxu0 0
        %927 = vmatprep.subr.bf16.mxu0 0
        %928 = vmatpush1.bf16.xpose.msra.mxu0 0
        %929 = vmatprep.subr.bf16.mxu0 0
        %930 = vmatpush1.bf16.xpose.msra.mxu0 0
        %931 = vmatprep.subr.bf16.mxu0 0
        %932 = vmatpush1.bf16.xpose.msra.mxu0 0
        %933 = vmatprep.subr.bf16.mxu0 0
        %934 = vmatpush1.bf16.xpose.msra.mxu0 0
        %935 = vmatprep.subr.bf16.mxu0 0
        %936 = vmatpush1.bf16.xpose.msra.mxu0 0
        %937 = vmatprep.subr.bf16.mxu0 0
        %938 = vmatpush1.bf16.xpose.msra.mxu0 0
        %939 = vmatprep.subr.bf16.mxu0 0
        %940 = vmatpush1.bf16.xpose.msra.mxu0 0
        %941 = vmatprep.subr.bf16.mxu0 0
        %942 = vmatpush1.bf16.xpose.msra.mxu0 0
        %943 = vmatprep.subr.bf16.mxu0 0
        %944 = vmatpush1.bf16.xpose.msra.mxu0 0
        %945 = vmatprep.mubr.bf16.mxu0 0
        %946 = vmatmul.mubr.bf16.gmra.mrb[0].mxu0 %v908
        %v947 = vpop.f32.mrb[0].mxu0
        %v948 = vadd.f32 0.0, %v947
        %v949 = vpop.f32.mrb[0].mxu0
        %v950 = vpop.f32.mrb[0].mxu0
        %v951 = vadd.f32 0.0, %v950
        %v952 = vpop.f32.mrb[0].mxu0
        %953 = vdwg.mxu0
        %v954 = vsel %vm590, %v948, -inf
        %955 = vmax.xlane.f32.xlu0 %v954
        %v956 = vpop.xlane.xlu0 %955
        %v957 = vsel %vm590, %v951, -inf
        %958 = vmax.xlane.f32.xlu0 %v957
        %v959 = vpop.xlane.xlu0 %958
        %v960 = vsub.f32 %v948, %v956
        %v961 = vsub.f32 %v951, %v959
        %v962 = vmul.f32 %v960, 1.442695
        %v963 = vpow.pop %v962
        %v964 = vmul.f32 %v961, 1.442695
        %v965 = vpow.pop %v964
        %v966 = vsel %vm590, %v963, 0.0
        %967 = vadd.xlane.f32.xlu0 %v966
        %v968 = vpop.xlane.xlu0 %967
        %v969 = vsel %vm590, %v965, 0.0
        %970 = vadd.xlane.f32.xlu0 %v969
        %v971 = vpop.xlane.xlu0 %970
        %v972 = vpack.c.bf16 %v965, %v963
        %973 = vrot.lane.b32.xlu0 %v541, 32
        %v974 = vpop.permute.xlu0 %973
        %v977 = vsel %vm590, %v972, 0
        %979 = vmatprep.subr.bf16.mxu0 0
        %980 = vmatpush1.bf16.msra.mxu0 %v974
        %981 = vmatprep.subr.bf16.mxu0 0
        %982 = vmatpush1.bf16.msra.mxu0 0
        %983 = vmatprep.subr.bf16.mxu0 0
        %984 = vmatpush1.bf16.msra.mxu0 0
        %985 = vmatprep.subr.bf16.mxu0 0
        %986 = vmatpush1.bf16.msra.mxu0 0
        %987 = vmatprep.subr.bf16.mxu0 0
        %988 = vmatpush1.bf16.msra.mxu0 0
        %989 = vmatprep.subr.bf16.mxu0 0
        %990 = vmatpush1.bf16.msra.mxu0 0
        %991 = vmatprep.subr.bf16.mxu0 0
        %992 = vmatpush1.bf16.msra.mxu0 0
        %993 = vmatprep.subr.bf16.mxu0 0
        %994 = vmatpush1.bf16.msra.mxu0 0
        %995 = vmatprep.subr.bf16.mxu0 0
        %996 = vmatpush1.bf16.msra.mxu0 0
        %997 = vmatprep.subr.bf16.mxu0 0
        %998 = vmatpush1.bf16.msra.mxu0 0
        %999 = vmatprep.subr.bf16.mxu0 0
        %1000 = vmatpush1.bf16.msra.mxu0 0
        %1001 = vmatprep.subr.bf16.mxu0 0
        %1002 = vmatpush1.bf16.msra.mxu0 0
        %1003 = vmatprep.subr.bf16.mxu0 0
        %1004 = vmatpush1.bf16.msra.mxu0 0
        %1005 = vmatprep.subr.bf16.mxu0 0
        %1006 = vmatpush1.bf16.msra.mxu0 0
        %1007 = vmatprep.subr.bf16.mxu0 0
        %1008 = vmatpush1.bf16.msra.mxu0 0
        %1009 = vmatprep.subr.bf16.mxu0 0
        %1010 = vmatpush1.bf16.msra.mxu0 0
        %1011 = vmatprep.mubr.bf16.mxu0 0
        %1012 = vmatmul.mubr.bf16.gmra.mrb[0].mxu0 %v977
        %v1013 = vpop.f32.mrb[0].mxu0
        %v1014 = vadd.f32 0.0, %v1013
        %v1015 = vpop.f32.mrb[0].mxu0
        %v1016 = vpop.f32.mrb[0].mxu0
        %v1017 = vadd.f32 0.0, %v1016
        %v1018 = vpop.f32.mrb[0].mxu0
        %1019 = vdwg.mxu0
        %v1020 = vrcp.pop %v968
        %v1021 = vrcp.pop %v971
        %v1022 = vmul.f32 %v1014, %v1020
        %v1023 = vmul.f32 %v1017, %v1021
        %1026 = vrot.lane.b32.xlu0 %v780, 32
        %v1027 = vpop.permute.xlu0 %1026
        %1028 = vrot.lane.b32.xlu0 %v781, 32
        %v1029 = vpop.permute.xlu0 %1028
        %1034 = vrot.lane.b32.xlu0 %v901, 64
        %v1035 = vpop.permute.xlu0 %1034
        %1036 = vrot.lane.b32.xlu0 %v902, 64
        %v1037 = vpop.permute.xlu0 %1036
        %1042 = vrot.lane.b32.xlu0 %v1022, 96
        %v1043 = vpop.permute.xlu0 %1042
        %1044 = vrot.lane.b32.xlu0 %v1023, 96
        %v1045 = vpop.permute.xlu0 %1044
        %v1048 = vsel %vm542, %v656, %v1027
        %v1049 = vsel %vm542, %v657, %v1029
        %vm1050 = vcmask 523264
        %v1051 = vsel %vm1050, %v1048, %v1035
        %v1052 = vsel %vm1050, %v1049, %v1037
        %vm1053 = vcmask 785408
        %v1054 = vsel %vm1053, %v1051, %v1043
        %v1055 = vsel %vm1053, %v1052, %v1045
        %v1056 = vpack.c.bf16 %v1055, %v1054
        %v1057 = vld [vmem:[#allocation7] sm:$0xf]
        %v1058 = vld [vmem:[#allocation7 + $0x4] sm:$0xf]
        %v1059 = vld [vmem:[#allocation7 + $0x8] sm:$0xf]
        %v1060 = vld [vmem:[#allocation7 + $0xc] sm:$0xf]
        %v1061 = vld [vmem:[#allocation7 + $0x10] sm:$0xf]
        %v1062 = vld [vmem:[#allocation7 + $0x14] sm:$0xf]
        %v1063 = vld [vmem:[#allocation7 + $0x18] sm:$0xf]
        %v1064 = vld [vmem:[#allocation7 + $0x1c] sm:$0xf]
        %v1065 = vld [vmem:[#allocation7 + $0x20] sm:$0xf]
        %v1066 = vld [vmem:[#allocation7 + $0x24] sm:$0xf]
        %v1067 = vld [vmem:[#allocation7 + $0x28] sm:$0xf]
        %v1068 = vld [vmem:[#allocation7 + $0x2c] sm:$0xf]
        %v1069 = vld [vmem:[#allocation7 + $0x30] sm:$0xf]
        %v1070 = vld [vmem:[#allocation7 + $0x34] sm:$0xf]
        %v1071 = vld [vmem:[#allocation7 + $0x38] sm:$0xf]
        %v1072 = vld [vmem:[#allocation7 + $0x3c] sm:$0xf]
        %v1073 = vld [vmem:[%s4] sm:$0x1]
        %v1075 = vlaneseq
        %v1076 = vshrl.u32 %v1075, 7
        %v1077 = vsub.s32 0, %v1076
        %v1078 = vrot.slane %v1073, %v1077
        %v1096 = vunpack.c.l.b16 %v1057
        %v1097 = vunpack.c.l.b16 %v1058
        %v1098 = vunpack.c.l.b16 %v1059
        %v1099 = vunpack.c.l.b16 %v1060
        %v1100 = vunpack.c.l.b16 %v1061
        %v1101 = vunpack.c.l.b16 %v1062
        %v1102 = vunpack.c.l.b16 %v1063
        %v1103 = vunpack.c.l.b16 %v1064
        %v1104 = vunpack.c.l.b16 %v1065
        %v1105 = vunpack.c.l.b16 %v1066
        %v1106 = vunpack.c.l.b16 %v1067
        %v1107 = vunpack.c.l.b16 %v1068
        %v1108 = vunpack.c.l.b16 %v1069
        %v1109 = vunpack.c.l.b16 %v1070
        %v1110 = vunpack.c.l.b16 %v1071
        %v1111 = vunpack.c.l.b16 %v1072
        %v1112 = vpack.c.b16 %v1097, %v1096
        %v1113 = vpack.c.b16 %v1099, %v1098
        %v1114 = vpack.c.b16 %v1101, %v1100
        %v1115 = vpack.c.b16 %v1103, %v1102
        %v1116 = vpack.c.b16 %v1105, %v1104
        %v1117 = vpack.c.b16 %v1107, %v1106
        %v1118 = vpack.c.b16 %v1109, %v1108
        %v1119 = vpack.c.b16 %v1111, %v1110
        %1128 = vmatprep.subr.bf16.mxu0 0
        %1129 = vmatpush1.bf16.msra.mxu0 %v1112
        %1130 = vmatprep.subr.bf16.mxu0 0
        %1131 = vmatpush1.bf16.msra.mxu0 %v1113
        %1132 = vmatprep.subr.bf16.mxu0 0
        %1133 = vmatpush1.bf16.msra.mxu0 %v1114
        %1134 = vmatprep.subr.bf16.mxu0 0
        %1135 = vmatpush1.bf16.msra.mxu0 %v1115
        %1136 = vmatprep.subr.bf16.mxu0 0
        %1137 = vmatpush1.bf16.msra.mxu0 %v1116
        %1138 = vmatprep.subr.bf16.mxu0 0
        %1139 = vmatpush1.bf16.msra.mxu0 %v1117
        %1140 = vmatprep.subr.bf16.mxu0 0
        %1141 = vmatpush1.bf16.msra.mxu0 %v1118
        %1142 = vmatprep.subr.bf16.mxu0 0
        %1143 = vmatpush1.bf16.msra.mxu0 %v1119
        %1144 = vmatprep.subr.bf16.mxu0 0
        %1145 = vmatpush1.bf16.msra.mxu0 0
        %1146 = vmatprep.subr.bf16.mxu0 0
        %1147 = vmatpush1.bf16.msra.mxu0 0
        %1148 = vmatprep.subr.bf16.mxu0 0
        %1149 = vmatpush1.bf16.msra.mxu0 0
        %1150 = vmatprep.subr.bf16.mxu0 0
        %1151 = vmatpush1.bf16.msra.mxu0 0
        %1152 = vmatprep.subr.bf16.mxu0 0
        %1153 = vmatpush1.bf16.msra.mxu0 0
        %1154 = vmatprep.subr.bf16.mxu0 0
        %1155 = vmatpush1.bf16.msra.mxu0 0
        %1156 = vmatprep.subr.bf16.mxu0 0
        %1157 = vmatpush1.bf16.msra.mxu0 0
        %1158 = vmatprep.subr.bf16.mxu0 0
        %1159 = vmatpush1.bf16.msra.mxu0 0
        %1160 = vmatprep.mubr.bf16.mxu0 0
        %1161 = vmatmul.mubr.bf16.gmra.mrb[0].mxu0 %v1056
        %v1162 = vpop.f32.mrb[0].mxu0
        %v1163 = vadd.f32 %v1078, %v1162
        %v1164 = vpop.f32.mrb[0].mxu0
        %v1165 = vpop.f32.mrb[0].mxu0
        %v1166 = vadd.f32 %v1078, %v1165
        %v1167 = vpop.f32.mrb[0].mxu0
        %1168 = vdwg.mxu0
        %1169 = vst [vmem:[%s271] sm:$0xff] %v1163
        %1170 = vst [vmem:[%s271 + $0x8] sm:$0xff] %v1166
        %s1171 = sand.u32 %s141, 1
        %s1172 = scalar_lea.sflag [#allocation4], %s1171
        %s1173 = sand.u32 %s141, 1
        %s1174 = smul.addr %s1173, 16
        %s1175 = scalar_lea.vmem [#allocation8], %s1174
        // Predicated region
        $region53: #{tpu_custom_call.1} parent=39 // pred_check
          %p1176 = pneg %p151
        $region54: #{tpu_custom_call.1} parent=39 // pred_check_branch
          %1178 = sbr.rel (%p1176) target = $region56
        $region55: #{tpu_custom_call.1} parent=39 // pred_region
          %s1180 = ssub.s32 256, 256
          %1181 = vsyncadd %s1172, %s1180
          %s1182 = smul.addr %s23, 2
          %s1183 = smul.addr %s1182, 128
          %s1184 = scalar_lea.hbm %s5, %s1183
          %s1185 = sshll.u32 %s1175, 4
          %s1186 = int_to_ptr.vmem [resolvable:$true] %s1185
          %1191 = dma.vmem_to_hbm [thread:$0]  %s1186, 256, %s1184, %s1172, 128, 128, 8
        $region56: #{tpu_custom_call.1} parent=39 // pred_fallthru
          _
      $region40: #{tpu_custom_call.1} parent=5 // pred_fallthru
        _
      %p1192 = scmp.le.s32.totalorder 2, %s18
      // Predicated region
      $region57: #{tpu_custom_call.1} parent=5 // pred_check
        %p1193 = pneg %p1192
      $region58: #{tpu_custom_call.1} parent=5 // pred_check_branch
        %1195 = sbr.rel (%p1193) target = $region60
      $region59: #{tpu_custom_call.1} parent=5 // pred_region
        %s1196 = ssub.s32 %s18, 2
        // Predicated region
        $region61: #{tpu_custom_call.1} parent=59 // pred_check
          %p1197 = pneg %p157
        $region62: #{tpu_custom_call.1} parent=59 // pred_check_branch
          %1199 = sbr.rel (%p1197) target = $region64
        $region63: #{tpu_custom_call.1} parent=59 // pred_region
          %s1200 = sand.u32 %s142, 1
          %s1201 = scalar_lea.sflag [#allocation4], %s1200
          %s1202 = sand.u32 %s142, 1
          %s1203 = smul.addr %s1202, 16
          %s1204 = scalar_lea.vmem [#allocation8], %s1203
          %1205 = dma.done %s1201, 256
        $region64: #{tpu_custom_call.1} parent=59 // pred_fallthru
          _
      $region60: #{tpu_custom_call.1} parent=5 // pred_fallthru
        _
    $region6: #{tpu_custom_call.1} parent=1 // loop_footer
      %s22 = sadd.s32 1, %s18
    $region7: #{tpu_custom_call.1} parent=1 // loop_footer_branch
      %17 = sbr.rel target = $region3
    $region8: #{tpu_custom_call.1} parent=1 // loop_exit
      _
    %1206 = vsyncpa [#allocation3], 1
    %s1207 = scalar_lea.sflag [#allocation3], 1
    %1208 = vsyncpa %s1207, 1
    %1209 = vsyncpa [#allocation6], 1
    %1210 = vsyncpa [#allocation4], 1
    %s1211 = scalar_lea.sflag [#allocation4], 1
    %1212 = vsyncpa %s1211, 1

</llo_original>
